<compile_context>
chip_gen: v7x
topology: tpu7x:2x2x1
jax: 0.10.0
libtpu: 0.0.40
codegen_flags: <defaults>
</compile_context>

<pallas_src>
import functools

import jax
import jax.numpy as jnp
import numpy as np
from jax.experimental import pallas as pl
from jax.experimental.pallas import tpu as pltpu


# ----------------------------------------------------------------- VMEM sizing

def _vmem_capacity_bytes():
    """Physical VMEM per core; conservative (v7x-safe) fallback if unknown."""
    try:
        get_info = getattr(pltpu, "get_tpu_info", None)
        if get_info is not None:
            cap = getattr(get_info(), "vmem_capacity_bytes", None)
            if cap:
                return int(cap)
    except Exception:
        pass
    return 64 * 1024 * 1024


def _vmem_params():
    cap = _vmem_capacity_bytes()
    if cap >= 128 * 1024 * 1024:            # v5e / v6e: plenty of headroom
        limit = 96 * 1024 * 1024
        block_budget = 16 * 1024 * 1024
    else:                                    # v7x (64 MiB per TC) or unknown
        limit = min(48 * 1024 * 1024, (cap * 3) // 4)
        block_budget = 5 * 1024 * 1024
    return cap, limit, block_budget


def _adjust_limit(limit, cap, block_bytes):
    # Pass 2 holds ~2 input + 2 output buffers of the x block (+ tiny mean).
    need = 5 * block_bytes + (4 << 20)
    return int(min(max(limit, need), cap - (8 << 20)))


def _largest_divisor_leq(n, k):
    k = max(1, min(n, k))
    best, i = 1, 1
    while i * i <= n:
        if n % i == 0:
            if i <= k:
                best = max(best, i)
            j = n // i
            if j <= k:
                best = max(best, j)
        i += 1
    return best


def _choose_l_block(L, C, itemsize, budget):
    """Largest multiple-of-128 L tile within the block budget (or full L)."""
    if C * L * itemsize <= budget:
        return L
    max_lb = (budget // max(1, C * itemsize)) // 128 * 128
    return max(128, max_lb)


# --------------------------------------------------------------------- kernels
# NCHW-style inputs are viewed (free reshape) as (N, C, L): per-channel mean
# over axes (0, 2); the lane axis is L (lane-dense loads/stores).

def _fused3d_kernel(x_ref, y_ref, mean_ref, *, inv_count):
    # Whole tensor resident: read x once, write y once.
    x = x_ref[...].astype(jnp.float32)                               # (N, C, L)
    m = jnp.sum(jnp.sum(x, axis=2, keepdims=True), axis=0, keepdims=True)
    m = m * inv_count                                                # (1, C, 1)
    mean_ref[...] = m
    y_ref[...] = (x - m).astype(y_ref.dtype)


def _blocked_sum3d_kernel(x_ref, psum_ref):
    # x_ref: (Nb, C, L); psum_ref: (1, C, 1), one block per grid step.
    x = x_ref[...].astype(jnp.float32)
    psum_ref[...] = jnp.sum(jnp.sum(x, axis=2, keepdims=True),
                            axis=0, keepdims=True)


def _partial_sum3d_kernel(x_ref, psum_ref, *, L, Lb, nl):
    # x_ref: (1, C, Lb); psum_ref: (1, C, 1) f32, resident across the l axis.
    li = pl.program_id(1)

    @pl.when(li == 0)
    def _():
        psum_ref[...] = jnp.zeros_like(psum_ref)

    x = x_ref[...].astype(jnp.float32)
    if L % Lb == 0:
        psum_ref[...] += jnp.sum(x, axis=2, keepdims=True)
    else:
        # Only the last L tile pays for the tail mask.
        @pl.when(li < nl - 1)
        def _():
            psum_ref[...] += jnp.sum(x, axis=2, keepdims=True)

        @pl.when(li == nl - 1)
        def _():
            lane = jax.lax.broadcasted_iota(jnp.int32, x.shape, 2)
            xm = jnp.where(li * Lb + lane < L, x, 0.0)
            psum_ref[...] += jnp.sum(xm, axis=2, keepdims=True)


def _subtract3d_kernel(x_ref, m_ref, y_ref):
    # x_ref/y_ref: (Nb, C, Lb); m_ref: (1, C, 1) f32 (resident across steps).
    y_ref[...] = (x_ref[...].astype(jnp.float32) - m_ref[...]).astype(y_ref.dtype)


# 2-D (N, C) inputs: keep C on the lane axis.

def _fused2d_kernel(x_ref, y_ref, mean_ref, *, inv_n):
    x = x_ref[...].astype(jnp.float32)                               # (N, C)
    m = jnp.sum(x, axis=0, keepdims=True) * inv_n                    # (1, C)
    mean_ref[...] = m
    y_ref[...] = (x - m).astype(y_ref.dtype)


def _partial_sum2d_kernel(x_ref, psum_ref, *, N, Nb, nb):
    # x_ref: (Nb, C); psum_ref: (1, 1, C), one block per grid step.
    gi = pl.program_id(0)
    x = x_ref[...].astype(jnp.float32)
    if N % Nb == 0:
        psum_ref[...] = jnp.sum(x, axis=0, keepdims=True)[None]
    else:
        @pl.when(gi < nb - 1)
        def _():
            psum_ref[...] = jnp.sum(x, axis=0, keepdims=True)[None]

        @pl.when(gi == nb - 1)
        def _():
            row = jax.lax.broadcasted_iota(jnp.int32, x.shape, 0)
            xm = jnp.where(gi * Nb + row < N, x, 0.0)
            psum_ref[...] = jnp.sum(xm, axis=0, keepdims=True)[None]


def _subtract2d_kernel(x_ref, m_ref, y_ref):
    # x_ref/y_ref: (Nb, C); m_ref: (1, C) f32 (resident across steps).
    y_ref[...] = (x_ref[...].astype(jnp.float32) - m_ref[...]).astype(y_ref.dtype)


# --------------------------------------------------------------------- drivers

def _forward_nchw(x3, running_mean, momentum, training, cap, limit, budget,
                  allow_fused):
    N, C, L = x3.shape
    itemsize = x3.dtype.itemsize

    # Fused single pass: whole tensor resident in VMEM -> 1 HBM read + 1 write.
    fused_need = x3.size * (4 * itemsize + 8) + (4 << 20)
    if training and allow_fused and fused_need <= limit:
        y3, mean3 = pl.pallas_call(
            functools.partial(_fused3d_kernel, inv_count=1.0 / float(N * L)),
            out_shape=(jax.ShapeDtypeStruct((N, C, L), x3.dtype),
                       jax.ShapeDtypeStruct((1, C, 1), jnp.float32)),
            grid=(1,),
            in_specs=[pl.BlockSpec((N, C, L), lambda i: (0, 0, 0))],
            out_specs=(pl.BlockSpec((N, C, L), lambda i: (0, 0, 0)),
                       pl.BlockSpec((1, C, 1), lambda i: (0, 0, 0))),
            compiler_params=pltpu.CompilerParams(
                dimension_semantics=("arbitrary",),
                vmem_limit_bytes=limit),
        )(x3)
        mean_f32 = mean3.reshape(C)
        new_rm = (running_mean.astype(jnp.float32) * (1.0 - momentum)
                  + momentum * mean_f32).astype(running_mean.dtype)
        return y3, new_rm

    # Shared tiling for the reduction and subtract passes.
    Lb = _choose_l_block(L, C, itemsize, budget)
    if Lb >= L:
        Lb, nl = L, 1
        Nb = _largest_divisor_leq(N, max(1, budget // max(1, C * L * itemsize)))
        ng = N // Nb
    else:
        nl = -(-L // Lb)
        Nb, ng = 1, N
    block_bytes = Nb * C * Lb * itemsize
    limit = _adjust_limit(limit, cap, block_bytes)

    if training:
        if nl == 1:
            # Full L per block: sum both axes per step, no resident accumulator.
            psum = pl.pallas_call(
                _blocked_sum3d_kernel,
                out_shape=jax.ShapeDtypeStruct((ng, C, 1), jnp.float32),
                grid=(ng,),
                in_specs=[pl.BlockSpec((Nb, C, L), lambda g: (g, 0, 0))],
                out_specs=pl.BlockSpec((1, C, 1), lambda g: (g, 0, 0)),
                compiler_params=pltpu.CompilerParams(
                    dimension_semantics=("parallel",),
                    vmem_limit_bytes=limit),
            )(x3)
            mean_f32 = psum.reshape(ng, C).sum(axis=0) / float(N * L)
        else:
            # Tiled L reduction with a resident (1, C, 1) f32 accumulator.
            psum = pl.pallas_call(
                functools.partial(_partial_sum3d_kernel, L=L, Lb=Lb, nl=nl),
                out_shape=jax.ShapeDtypeStruct((N, C, 1), jnp.float32),
                grid=(N, nl),
                in_specs=[pl.BlockSpec((1, C, Lb), lambda n, l: (n, 0, l))],
                out_specs=pl.BlockSpec((1, C, 1), lambda n, l: (n, 0, 0)),
                compiler_params=pltpu.CompilerParams(
                    dimension_semantics=("parallel", "arbitrary"),
                    vmem_limit_bytes=limit),
            )(x3)
            mean_f32 = psum.reshape(N, C).sum(axis=0) / float(N * L)
        new_rm = (running_mean.astype(jnp.float32) * (1.0 - momentum)
                  + momentum * mean_f32).astype(running_mean.dtype)
        sub_mean = mean_f32
    else:
        sub_mean = running_mean.astype(jnp.float32)
        new_rm = running_mean

    m3 = sub_mean.reshape(1, C, 1)
    y3 = pl.pallas_call(
        _subtract3d_kernel,
        out_shape=jax.ShapeDtypeStruct((N, C, L), x3.dtype),
        grid=(ng, nl),
        in_specs=[pl.BlockSpec((Nb, C, Lb), lambda g, l: (g, 0, l)),
                  pl.BlockSpec((1, C, 1), lambda g, l: (0, 0, 0))],
        out_specs=pl.BlockSpec((Nb, C, Lb), lambda g, l: (g, 0, l)),
        compiler_params=pltpu.CompilerParams(
            dimension_semantics=("parallel", "parallel"),
            vmem_limit_bytes=limit),
    )(x3, m3)
    return y3, new_rm


def _forward_2d(x, running_mean, momentum, training, cap, limit, budget,
                allow_fused):
    N, C = x.shape
    itemsize = x.dtype.itemsize

    fused_need = x.size * (4 * itemsize + 8) + (4 << 20)
    if training and allow_fused and fused_need <= limit:
        y, mean2 = pl.pallas_call(
            functools.partial(_fused2d_kernel, inv_n=1.0 / float(N)),
            out_shape=(jax.ShapeDtypeStruct((N, C), x.dtype),
                       jax.ShapeDtypeStruct((1, C), jnp.float32)),
            grid=(1,),
            in_specs=[pl.BlockSpec((N, C), lambda i: (0, 0))],
            out_specs=(pl.BlockSpec((N, C), lambda i: (0, 0)),
                       pl.BlockSpec((1, C), lambda i: (0, 0))),
            compiler_params=pltpu.CompilerParams(
                dimension_semantics=("arbitrary",),
                vmem_limit_bytes=limit),
        )(x)
        mean_f32 = mean2.reshape(C)
        new_rm = (running_mean.astype(jnp.float32) * (1.0 - momentum)
                  + momentum * mean_f32).astype(running_mean.dtype)
        return y, new_rm

    rows_budget = max(1, budget // max(1, C * itemsize))
    if N <= rows_budget or N <= 8:
        Nb = N
    else:
        Nb = min(N, max(8, (rows_budget // 8) * 8))
    ng = -(-N // Nb)
    limit = _adjust_limit(limit, cap, Nb * C * itemsize)

    if training:
        psum = pl.pallas_call(
            functools.partial(_partial_sum2d_kernel, N=N, Nb=Nb, nb=ng),
            out_shape=jax.ShapeDtypeStruct((ng, 1, C), jnp.float32),
            grid=(ng,),
            in_specs=[pl.BlockSpec((Nb, C), lambda g: (g, 0))],
            out_specs=pl.BlockSpec((1, 1, C), lambda g: (g, 0, 0)),
            compiler_params=pltpu.CompilerParams(
                dimension_semantics=("parallel",),
                vmem_limit_bytes=limit),
        )(x)
        mean_f32 = psum.reshape(ng, C).sum(axis=0) / float(N)
        new_rm = (running_mean.astype(jnp.float32) * (1.0 - momentum)
                  + momentum * mean_f32).astype(running_mean.dtype)
        sub_mean = mean_f32
    else:
        sub_mean = running_mean.astype(jnp.float32)
        new_rm = running_mean

    m2 = sub_mean.reshape(1, C)
    y = pl.pallas_call(
        _subtract2d_kernel,
        out_shape=jax.ShapeDtypeStruct((N, C), x.dtype),
        grid=(ng,),
        in_specs=[pl.BlockSpec((Nb, C), lambda g: (g, 0)),
                  pl.BlockSpec((1, C), lambda g: (0, 0))],
        out_specs=pl.BlockSpec((Nb, C), lambda g: (g, 0)),
        compiler_params=pltpu.CompilerParams(
            dimension_semantics=("parallel",),
            vmem_limit_bytes=limit),
    )(x, m2)
    return y, new_rm


def mean_norm_forward(x, running_mean, momentum=0.1, training=True,
                      _debug_block_budget=None):
    """MeanNorm.forward for NCHW (>2-D) or (N, C) inputs.

    Returns (y, new_running_mean); in eval mode new_running_mean == running_mean.
    `_debug_block_budget` (tests only) overrides the block budget and disables
    the fused single-pass path so the tiled paths can be exercised.
    """
    cap, limit, budget = _vmem_params()
    allow_fused = _debug_block_budget is None
    if _debug_block_budget is not None:
        budget = int(_debug_block_budget)

    orig_shape = x.shape
    if x.ndim > 2:
        N, C = x.shape[0], x.shape[1]
        L = int(np.prod(x.shape[2:]))
        x3 = x.reshape(N, C, L)                     # free view, no transpose
        y3, new_rm = _forward_nchw(x3, running_mean, momentum, training,
                                   cap, limit, budget, allow_fused)
        return y3.reshape(orig_shape), new_rm
    return _forward_2d(x, running_mean, momentum, training,
                       cap, limit, budget, allow_fused)


# ------------------------------------------------------------------- self-test

def _ref_forward(x, running_mean, momentum, training):
    y = x.reshape(x.shape[0], x.shape[1], -1)
    if training:
        mean = y.mean(axis=-1).mean(axis=0) if x.ndim > 2 else x.mean(axis=0)
        new_rm = running_mean * (1 - momentum) + momentum * mean
    else:
        mean = running_mean
        new_rm = running_mean
    return (y - mean[None, :, None]).reshape(x.shape), new_rm


if __name__ == "__main__":
    key = jax.random.PRNGKey(0)
    momentum = 0.1

    def check(xa, rm, training, **kw):
        y, new_rm = mean_norm_forward(xa, rm, momentum=momentum,
                                      training=training, **kw)
        jax.block_until_ready(y)
        jax.block_until_ready(new_rm)
        ry, rrm = _ref_forward(xa, rm, momentum, training)
        assert jnp.allclose(y, ry, atol=1e-5), "output mismatch"
        assert jnp.allclose(new_rm, rrm, atol=1e-5), "running_mean mismatch"
        return new_rm

    # 4-D NCHW — training uses the fused single-pass kernel at this size.
    x = jax.random.normal(key, (2, 4, 16, 16), dtype=jnp.float32)
    rm = jnp.zeros((4,), dtype=jnp.float32)
    rm1 = check(x, rm, training=True)
    # Eval: tiled subtract of the running mean.
    check(x, rm1, training=False)
    # Forced two-pass path, blocked-n reduction (full L per block).
    check(x, rm, training=True, _debug_block_budget=4 * 256 * 4)
    # Forced two-pass path with L tiling + tail mask (L = 288, Lb = 128).
    x_t = jax.random.normal(jax.random.fold_in(key, 1), (2, 4, 16, 18),
                            dtype=jnp.float32)
    check(x_t, rm, training=True, _debug_block_budget=4 * 128 * 4)

    # 2-D (N, C) — lane-dense C path: fused training, eval, tiled/masked pass 1.
    x2 = jax.random.normal(jax.random.fold_in(key, 2), (16, 32),
                           dtype=jnp.float32)
    rm2 = jnp.zeros((32,), dtype=jnp.float32)
    rm2n = check(x2, rm2, training=True)
    check(x2, rm2n, training=False)
    x2b = jax.random.normal(jax.random.fold_in(key, 3), (20, 128),
                            dtype=jnp.float32)
    check(x2b, jnp.zeros((128,), jnp.float32), training=True,
          _debug_block_budget=8 * 128 * 4)

    print("KERNEL_OK")
</pallas_src>

<mosaic_0001>
module attributes {stable_mosaic.version = 11 : i64} {
  func.func @_fused3d_kernel(%arg0: i32, %arg1: memref<2x4x256xf32, #tpu.memory_space<vmem>>, %arg2: memref<2x4x256xf32, #tpu.memory_space<vmem>>, %arg3: memref<1x4x1xf32, #tpu.memory_space<vmem>>) attributes {dimension_semantics = [#tpu.dimension_semantics<arbitrary>], iteration_bounds = array<i64: 1>, scalar_prefetch = 0 : i64, scratch_operands = 0 : i64, tpu.core_type = #tpu.core_type<tc>, window_params = [{pipeline_mode = #tpu.pipeline_mode<synchronous>, transform_indices = @transform_0, window_bounds = array<i64: 2, 4, 256>}, {pipeline_mode = #tpu.pipeline_mode<synchronous>, transform_indices = @transform_1, window_bounds = array<i64: 2, 4, 256>}, {pipeline_mode = #tpu.pipeline_mode<synchronous>, transform_indices = @transform_2, window_bounds = array<i64: 1, 4, 1>}]} {
    %c0 = arith.constant 0 : index
    %c0_0 = arith.constant 0 : index
    %c0_1 = arith.constant 0 : index
    %0 = vector.load %arg1[%c0, %c0_0, %c0_1] : memref<2x4x256xf32, #tpu.memory_space<vmem>>, vector<2x4x256xf32>
    %cst = arith.constant dense<0.000000e+00> : vector<2x4xf32>
    %1 = vector.multi_reduction <add>, %0, %cst [2] : vector<2x4x256xf32> to vector<2x4xf32>
    %2 = vector.shape_cast %1 : vector<2x4xf32> to vector<2x4x1xf32>
    %cst_2 = arith.constant dense<0.000000e+00> : vector<4x1xf32>
    %3 = vector.multi_reduction <add>, %2, %cst_2 [0] : vector<2x4x1xf32> to vector<4x1xf32>
    %4 = vector.shape_cast %3 : vector<4x1xf32> to vector<1x4x1xf32>
    %cst_3 = arith.constant 0.001953125 : f32
    %5 = vector.broadcast %cst_3 : f32 to vector<1x4x1xf32>
    %6 = arith.mulf %4, %5 : vector<1x4x1xf32>
    %c0_4 = arith.constant 0 : index
    %c0_5 = arith.constant 0 : index
    %c0_6 = arith.constant 0 : index
    %7 = vector.load %arg3[%c0_4, %c0_5, %c0_6] : memref<1x4x1xf32, #tpu.memory_space<vmem>>, vector<1x4x1xf32>
    tpu.vector_store %arg3[%c0_4, %c0_5, %c0_6], %6 {strides = array<i32>} : memref<1x4x1xf32, #tpu.memory_space<vmem>>, vector<1x4x1xf32>,
    %8 = vector.broadcast %6 : vector<1x4x1xf32> to vector<2x4x256xf32>
    %9 = arith.subf %0, %8 : vector<2x4x256xf32>
    %c0_7 = arith.constant 0 : index
    %c0_8 = arith.constant 0 : index
    %c0_9 = arith.constant 0 : index
    %10 = vector.load %arg2[%c0_7, %c0_8, %c0_9] : memref<2x4x256xf32, #tpu.memory_space<vmem>>, vector<2x4x256xf32>
    tpu.vector_store %arg2[%c0_7, %c0_8, %c0_9], %9 {strides = array<i32>} : memref<2x4x256xf32, #tpu.memory_space<vmem>>, vector<2x4x256xf32>,
    return
  }
  func.func @transform_0(%arg0: i32) -> (i32, i32, i32) {
    %c0_i32 = arith.constant 0 : i32
    %c0_i32_0 = arith.constant 0 : i32
    %c0_i32_1 = arith.constant 0 : i32
    %c0_i32_2 = arith.constant 0 : i32
    return %c0_i32, %c0_i32_0, %c0_i32_1 : i32, i32, i32
  }
  func.func @transform_1(%arg0: i32) -> (i32, i32, i32) {
    %c0_i32 = arith.constant 0 : i32
    %c0_i32_0 = arith.constant 0 : i32
    %c0_i32_1 = arith.constant 0 : i32
    %c0_i32_2 = arith.constant 0 : i32
    return %c0_i32, %c0_i32_0, %c0_i32_1 : i32, i32, i32
  }
  func.func @transform_2(%arg0: i32) -> (i32, i32, i32) {
    %c0_i32 = arith.constant 0 : i32
    %c0_i32_0 = arith.constant 0 : i32
    %c0_i32_1 = arith.constant 0 : i32
    %c0_i32_2 = arith.constant 0 : i32
    return %c0_i32, %c0_i32_0, %c0_i32_1 : i32, i32, i32
  }
}

</mosaic_0001>

<llo_original>
// kernel: tpu_custom_call.1
$region0: #{tpu_custom_call.1}
  #allocation0 [shape = 'u32[]', space=smem, size = 0x4, offset = 0x4, fixed_abs, tag = 'smem constant byte address 0x4 - core index']
  #allocation1 [shape = 'u32[144,128]{1,0:T(1,128)}', space=vmem, size = 0x12000, scoped, tag = 'internal scratch']
  %s0 = inlined_call_operand.hbm [shape: f32[2,4,256], index: 0, kind: input, shape index: {}]
  %s1 = inlined_call_operand.hbm [shape: f32[2,4,256], index: 1, kind: output, shape index: {0}]
  %s2 = inlined_call_operand.vmem [shape: f32[1,4,1], index: 2, kind: output, shape index: {1}]
  %3 = xla_tuple %s1, %s2
  %s4 = sld [smem:[#allocation0]]
  $region26: #{tpu_custom_call.1} parent=0
    _
  %s6 = ssub.s32 1, %s4
  %s7 = scalar_select 0, %s6, %s4
  $region1: #{tpu_custom_call.1} parent=0
    #allocation2 [shape = 'u8[8192]{0}', space=vmem, size = 0x2000, scoped, tag = 'input window, operand 0, single buffered']
    #allocation3 [shape = 's32[1]{0}', space=sflag, size = 0x4, scoped, tag = 'scoped memory for tpu_custom_call.1']
    #allocation4 [shape = 's32[1]{0}', space=sflag, size = 0x4, scoped, tag = 'scoped memory for tpu_custom_call.1']
    #allocation5 [shape = 'u8[8192]{0}', space=vmem, size = 0x2000, scoped, tag = 'output window, operand 0, single buffered']
    %8 = vsyncpa [#allocation3], 0
    %9 = vsyncpa [#allocation4], 0
    // Predicated region
    $region2: #{tpu_custom_call.1} parent=1 // pred_check
      _
    $region3: #{tpu_custom_call.1} parent=1 // pred_check_branch
      %11 = sbr.rel (0) target = $region5
    $region4: #{tpu_custom_call.1} parent=1 // pred_region
      %s13 = ssub.s32 256, 256
      %14 = vsyncadd [#allocation3], %s13
      %s15 = sshll.u32 [#allocation2], 4
      %s16 = int_to_ptr.vmem [resolvable:$true] %s15
      %21 = dma.hbm_to_vmem [thread:$0]  %s0, 256, %s16, [#allocation3], 128, 128, 8
    $region5: #{tpu_custom_call.1} parent=1 // pred_fallthru
      _
    // Predicated region
    $region6: #{tpu_custom_call.1} parent=1 // pred_check
      _
    $region7: #{tpu_custom_call.1} parent=1 // pred_check_branch
      %23 = sbr.rel (0) target = $region9
    $region8: #{tpu_custom_call.1} parent=1 // pred_region
      %24 = dma.done [#allocation3], 256
    $region9: #{tpu_custom_call.1} parent=1 // pred_fallthru
      _
    %v25 = vld [vmem:[#allocation2] sm:$0xff]
    %v26 = vld [vmem:[#allocation2 + $0x8] sm:$0xff]
    %v29 = vcombine.high %v25, %v25
    %v30 = vcombine.high %v26, %v26
    %vm33 = vcmask 1043456
    %v34 = vsel %vm33, %v25, 0.0
    %v35 = vsel %vm33, %v29, 0.0
    %v36 = vadd.f32 %v34, %v35
    %37 = vadd.xlane.f32.xlu0 %v36
    %v38 = vpop.xlane.xlu0 %37
    %v39 = vsel %vm33, %v26, 0.0
    %v40 = vsel %vm33, %v30, 0.0
    %v41 = vadd.f32 %v39, %v40
    %42 = vadd.xlane.f32.xlu0 %v41
    %v43 = vpop.xlane.xlu0 %42
    %v44 = vsel %vm33, %v38, 0.0
    %v45 = vsel %vm33, %v43, 0.0
    %v46 = vadd.f32 %v44, %v45
    %v47 = vmul.f32 %v46, 0.001953125
    %vm48 = vcmask 3072
    %49 = vst.msk [vmem:[%s2] sm:$0xf] %vm48, %v47
    %v52 = vunpack.c.l.s4 839922192
    %v53 = vunpack.c.0.s8 %v52
    %v54 = vlaneseq
    %v55 = vshrl.u32 %v54, 7
    %v56 = vsub.s32 %v53, %v55
    %v57 = vrot.slane %v47, %v56
    %v59 = vsub.f32 %v25, %v57
    %v60 = vsub.f32 %v26, %v57
    %61 = vst [vmem:[#allocation5] sm:$0xff] %v59
    %62 = vst [vmem:[#allocation5 + $0x8] sm:$0xff] %v60
    // Predicated region
    $region10: #{tpu_custom_call.1} parent=1 // pred_check
      _
    $region11: #{tpu_custom_call.1} parent=1 // pred_check_branch
      %64 = sbr.rel (0) target = $region13
    $region12: #{tpu_custom_call.1} parent=1 // pred_region
      %s66 = ssub.s32 256, 256
      %67 = vsyncadd [#allocation4], %s66
      %s68 = sshll.u32 [#allocation5], 4
      %s69 = int_to_ptr.vmem [resolvable:$true] %s68
      %74 = dma.vmem_to_hbm [thread:$0]  %s69, 256, %s1, [#allocation4], 128, 128, 8
    $region13: #{tpu_custom_call.1} parent=1 // pred_fallthru
      _
    // Predicated region
    $region14: #{tpu_custom_call.1} parent=1 // pred_check
      _
    $region15: #{tpu_custom_call.1} parent=1 // pred_check_branch
      %76 = sbr.rel (0) target = $region17
    $region16: #{tpu_custom_call.1} parent=1 // pred_region
      _
    $region17: #{tpu_custom_call.1} parent=1 // pred_fallthru
      _
    // Predicated region
    $region18: #{tpu_custom_call.1} parent=1 // pred_check
      _
    $region19: #{tpu_custom_call.1} parent=1 // pred_check_branch
      %78 = sbr.rel (0) target = $region21
    $region20: #{tpu_custom_call.1} parent=1 // pred_region
      %79 = dma.done [#allocation4], 256
    $region21: #{tpu_custom_call.1} parent=1 // pred_fallthru
      _
    // Predicated region
    $region22: #{tpu_custom_call.1} parent=1 // pred_check
      _
    $region23: #{tpu_custom_call.1} parent=1 // pred_check_branch
      %81 = sbr.rel (0) target = $region25
    $region24: #{tpu_custom_call.1} parent=1 // pred_region
      _
    $region25: #{tpu_custom_call.1} parent=1 // pred_fallthru
      _
    %82 = vsyncpa [#allocation3], 1
    %83 = vsyncpa [#allocation4], 1

</llo_original>
